<compile_context>
chip_gen: v5e
topology: v5e:2x2
jax: 0.10.0
libtpu: 0.0.40
codegen_flags: <defaults>
</compile_context>

<pallas_src>
import math

import jax
import jax.numpy as jnp
from jax.experimental import pallas as pl
from jax.experimental.pallas import tpu as pltpu

M_MARGIN = 4            # m = 4  ->  cos(4t) = 8c^4 - 8c^2 + 1
PI_CONST = 3.14159265   # the literal (truncated-pi) constant in the PyTorch code

# k = floor(m*theta / PI_CONST) = #{ j in 1..m : theta >= j*PI_CONST/m }
#   = #{ j : cos_theta <= cos(j*PI_CONST/m) }      (cos monotone on [0, pi])
_THRESH = tuple(math.cos(j * PI_CONST / M_MARGIN) for j in range(1, M_MARGIN + 1))


def _vmem_capacity_bytes():
    """Per-TensorCore VMEM capacity; conservative fallback if unavailable."""
    try:
        return int(pltpu.get_tpu_info().vmem_capacity_bytes)
    except Exception:
        return 64 * (1 << 20)          # v7x-sized (safe on every generation)


def _row_norm_kernel(x_ref, xlen_ref, inv_xlen_ref):
    """Per-row |x| and 1/|x| (hoisted out of the main grid)."""
    xf = x_ref[...].astype(jnp.float32)
    sumsq = jnp.sum(xf * xf, axis=1, keepdims=True)       # (tb, 1)
    xlen_ref[...] = jnp.sqrt(sumsq)
    inv_xlen_ref[...] = jax.lax.rsqrt(sumsq)


def _angle_linear_kernel(x_ref, w_ref, xlen_ref, ixlen_ref,
                         cos_ref, phi_ref, iwn_scratch):
    # Grid = (class tile j [outer, "parallel"], batch tile i [inner, "arbitrary"]).
    w = w_ref[...]                                         # (D, tc) resident slab

    # Column inverse norms: computed once per class tile (first batch step) from
    # the already-resident weight tile, cached in VMEM scratch for the rest of
    # the inner batch loop.
    @pl.when(pl.program_id(1) == 0)
    def _():
        wf = w.astype(jnp.float32)
        iwn_scratch[...] = jax.lax.rsqrt(jnp.sum(wf * wf, axis=0, keepdims=True))

    inv_wnorm = iwn_scratch[...]                           # (1, tc)
    xlen = xlen_ref[...]                                   # (tb, 1)
    inv_xlen = ixlen_ref[...]                              # (tb, 1)

    dot = jnp.dot(x_ref[...], w, preferred_element_type=jnp.float32)  # (tb, tc)

    # cos_theta * |x| with the clamp fused: clip(dot/|w_col|, -|x|, +|x|).
    s = dot * inv_wnorm
    cos_out = jnp.minimum(jnp.maximum(s, -xlen), xlen)     # = clip(ct,-1,1)*|x|
    ct = cos_out * inv_xlen                                # clipped cos(theta)

    # cos(4*theta) = 8c^4 - 8c^2 + 1 = 8*c2*(c2 - 1) + 1
    c2 = ct * ct
    cos_m_theta = 8.0 * c2 * (c2 - 1.0) + 1.0

    # k = floor(4*theta/PI_CONST) and (-1)^k via VPU compares (no arccos):
    # thresholds are decreasing, so k = sum(flags) and (-1)^k = XOR parity.
    b0 = ct <= _THRESH[0]
    b1 = ct <= _THRESH[1]
    b2 = ct <= _THRESH[2]
    b3 = ct <= _THRESH[3]
    parity = jnp.logical_xor(jnp.logical_xor(b0, b1), jnp.logical_xor(b2, b3))
    kf = (b0.astype(jnp.float32) + b1.astype(jnp.float32)
          + b2.astype(jnp.float32) + b3.astype(jnp.float32))
    phi = jnp.where(parity, -cos_m_theta, cos_m_theta) - (kf + kf)

    cos_ref[...] = cos_out.astype(cos_ref.dtype)
    phi_ref[...] = (phi * xlen).astype(phi_ref.dtype)


def angle_linear(x, weight, *, tb=None, tc=None, use_bf16_mxu=True,
                 out_dtype=jnp.float32):
    """cos_theta, phi_theta = AngleLinear(in,out,m=4,phiflag=True).forward(x)."""
    B, D = x.shape
    D2, C = weight.shape
    assert D == D2, "x feature dim must match weight rows"

    vmem_cap = _vmem_capacity_bytes()
    big_vmem = vmem_cap >= 96 * (1 << 20)        # v5e/v6e: 128 MiB; v7x: 64 MiB

    # Tile defaults: full extent for small dims, otherwise lane/sublane-aligned
    # tiles sized to the generation's VMEM.
    if tb is None:
        tb = min(B, 512 if big_vmem else 256)
    if tc is None:
        tc = min(C, 2048 if big_vmem else 1024)

    feed_item = 2 if use_bf16_mxu else 4
    out_item = jnp.dtype(out_dtype).itemsize

    def est_vmem(tb_, tc_):
        per_in = tb_ * D * feed_item + D * tc_ * feed_item + 2 * tb_ * 4
        per_out = 2 * tb_ * tc_ * out_item
        return 2 * (per_in + per_out) + tc_ * 4            # x2: double-buffering

    budget = int(0.75 * vmem_cap)                          # generation-aware cap
    # TODO(synk): for very large in_features (D >~ 4K) add a K grid axis with an
    # f32 accumulator scratch instead of holding the full (D, tc) slab in VMEM.
    while est_vmem(tb, tc) > budget and tc > 256:
        tc //= 2
    while est_vmem(tb, tc) > budget and tb > 64:
        tb //= 2

    grid_b = pl.cdiv(B, tb)
    grid_c = pl.cdiv(C, tc)

    # ---- prologue: per-row |x| and 1/|x| (one cheap pass over x) ------------
    tbp = B if B <= 1024 else 1024
    xlen, inv_xlen = pl.pallas_call(
        _row_norm_kernel,
        out_shape=(jax.ShapeDtypeStruct((B, 1), jnp.float32),
                   jax.ShapeDtypeStruct((B, 1), jnp.float32)),
        grid=(pl.cdiv(B, tbp),),
        in_specs=[pl.BlockSpec((tbp, D), lambda i: (i, 0))],
        out_specs=(pl.BlockSpec((tbp, 1), lambda i: (i, 0)),
                   pl.BlockSpec((tbp, 1), lambda i: (i, 0))),
        compiler_params=pltpu.CompilerParams(dimension_semantics=("parallel",)),
    )(x)

    # ---- one-time cast of the MXU feeds (stream from HBM at half bytes) -----
    if use_bf16_mxu:
        x_feed = x.astype(jnp.bfloat16)
        w_feed = weight.astype(jnp.bfloat16)
    else:
        x_feed = x.astype(jnp.float32)
        w_feed = weight.astype(jnp.float32)

    est = est_vmem(tb, tc)
    vmem_limit = None
    if est > 28 * (1 << 20):                     # raise scoped limit only if needed
        vmem_limit = min(budget, max(int(est * 5 // 4), 32 * (1 << 20)))

    out_shape = (jax.ShapeDtypeStruct((B, C), out_dtype),
                 jax.ShapeDtypeStruct((B, C), out_dtype))

    # ---- main kernel: classes OUTER (weight-resident), batch INNER ----------
    return pl.pallas_call(
        _angle_linear_kernel,
        out_shape=out_shape,
        grid=(grid_c, grid_b),
        in_specs=[
            pl.BlockSpec((tb, D), lambda j, i: (i, 0)),    # x tile (streams)
            pl.BlockSpec((D, tc), lambda j, i: (0, j)),    # weight tile (resident)
            pl.BlockSpec((tb, 1), lambda j, i: (i, 0)),    # |x| per row (hoisted)
            pl.BlockSpec((tb, 1), lambda j, i: (i, 0)),    # 1/|x| per row
        ],
        out_specs=(
            pl.BlockSpec((tb, tc), lambda j, i: (i, j)),
            pl.BlockSpec((tb, tc), lambda j, i: (i, j)),
        ),
        scratch_shapes=[pltpu.VMEM((1, tc), jnp.float32)],  # cached 1/||w_col||
        compiler_params=pltpu.CompilerParams(
            dimension_semantics=("parallel", "arbitrary"),
            vmem_limit_bytes=vmem_limit,
        ),
    )(x_feed, w_feed, xlen, inv_xlen)


if __name__ == "__main__":
    key = jax.random.PRNGKey(0)
    kx, kw = jax.random.split(key)

    # Small shapes; tb=8, tc=128 gives a non-trivial 2x2 grid.
    B, in_features, out_features = 16, 32, 256

    # weight.data.uniform_(-1, 1); the __init__ renorm is redundant because
    # forward() re-renorms the weight every call.
    weight = jax.random.uniform(kw, (in_features, out_features), jnp.float32,
                                minval=-1.0, maxval=1.0)
    x = jax.random.normal(kx, (B, in_features), jnp.float32)

    # f32 MXU path: close numeric parity with the PyTorch reference.
    cos_theta, phi_theta = angle_linear(x, weight, tb=8, tc=128,
                                        use_bf16_mxu=False)
    jax.block_until_ready((cos_theta, phi_theta))

    # ---- pure-JAX reference that follows the PyTorch forward literally ------
    wnorm = jnp.sqrt(jnp.sum(weight ** 2, axis=0, keepdims=True))
    scale = jnp.where(wnorm > 1e-5, 1e-5 / (wnorm + 1e-7), 1.0) * 1e5
    ww = weight * scale
    xlen_ref_ = jnp.sqrt(jnp.sum(x ** 2, axis=1, keepdims=True))
    wlen = jnp.sqrt(jnp.sum(ww ** 2, axis=0, keepdims=True))
    ct = jnp.clip(
        jnp.dot(x, ww, precision=jax.lax.Precision.HIGHEST) / xlen_ref_ / wlen,
        -1.0, 1.0)
    cmt = 8.0 * ct ** 4 - 8.0 * ct ** 2 + 1.0
    k = jnp.floor(M_MARGIN * jnp.arccos(ct) / PI_CONST)
    phi = jnp.where(jnp.mod(k, 2.0) == 0.0, 1.0, -1.0) * cmt - 2.0 * k
    ref_cos = ct * xlen_ref_
    ref_phi = phi * xlen_ref_

    assert jnp.allclose(cos_theta, ref_cos, atol=1e-3, rtol=1e-3), (
        "cos mismatch, max abs err = %e"
        % float(jnp.max(jnp.abs(cos_theta - ref_cos))))
    assert jnp.allclose(phi_theta, ref_phi, atol=1e-3, rtol=1e-3), (
        "phi mismatch, max abs err = %e"
        % float(jnp.max(jnp.abs(phi_theta - ref_phi))))

    # bf16 MXU feed (performance default): exercised for compile/run and checked
    # loosely on cos only — bf16 rounding near the cos(j*pi/4) thresholds can
    # flip k by +-1, which moves phi by +-2*|x| for borderline elements.
    cos_bf, phi_bf = angle_linear(x, weight, tb=8, tc=128)   # use_bf16_mxu=True
    jax.block_until_ready((cos_bf, phi_bf))
    assert jnp.allclose(cos_bf, ref_cos, atol=2e-1, rtol=1e-1), (
        "bf16 cos sanity check failed, max abs err = %e"
        % float(jnp.max(jnp.abs(cos_bf - ref_cos))))

    print("KERNEL_OK")
</pallas_src>

<mosaic_0001>
module attributes {stable_mosaic.version = 11 : i64} {
  func.func @_row_norm_kernel(%arg0: i32, %arg1: memref<16x32xf32, #tpu.memory_space<vmem>>, %arg2: memref<16x1xf32, #tpu.memory_space<vmem>>, %arg3: memref<16x1xf32, #tpu.memory_space<vmem>>) attributes {dimension_semantics = [#tpu.dimension_semantics<parallel>], iteration_bounds = array<i64: 1>, scalar_prefetch = 0 : i64, scratch_operands = 0 : i64, tpu.core_type = #tpu.core_type<tc>, window_params = [{transform_indices = @transform_0, window_bounds = array<i64: 16, 32>}, {transform_indices = @transform_1, window_bounds = array<i64: 16, 1>}, {transform_indices = @transform_2, window_bounds = array<i64: 16, 1>}]} {
    %c0 = arith.constant 0 : index
    %c0_0 = arith.constant 0 : index
    %0 = vector.load %arg1[%c0, %c0_0] : memref<16x32xf32, #tpu.memory_space<vmem>>, vector<16x32xf32>
    %1 = arith.mulf %0, %0 : vector<16x32xf32>
    %cst = arith.constant dense<0.000000e+00> : vector<16xf32>
    %2 = vector.multi_reduction <add>, %1, %cst [1] : vector<16x32xf32> to vector<16xf32>
    %3 = vector.shape_cast %2 : vector<16xf32> to vector<16x1xf32>
    %4 = math.sqrt %3 : vector<16x1xf32>
    %c0_1 = arith.constant 0 : index
    %c0_2 = arith.constant 0 : index
    %5 = vector.load %arg2[%c0_1, %c0_2] : memref<16x1xf32, #tpu.memory_space<vmem>>, vector<16x1xf32>
    tpu.vector_store %arg2[%c0_1, %c0_2], %4 {strides = array<i32>} : memref<16x1xf32, #tpu.memory_space<vmem>>, vector<16x1xf32>,
    %6 = math.rsqrt %3 : vector<16x1xf32>
    %c0_3 = arith.constant 0 : index
    %c0_4 = arith.constant 0 : index
    %7 = vector.load %arg3[%c0_3, %c0_4] : memref<16x1xf32, #tpu.memory_space<vmem>>, vector<16x1xf32>
    tpu.vector_store %arg3[%c0_3, %c0_4], %6 {strides = array<i32>} : memref<16x1xf32, #tpu.memory_space<vmem>>, vector<16x1xf32>,
    return
  }
  func.func @transform_0(%arg0: i32) -> (i32, i32) {
    %c0_i32 = arith.constant 0 : i32
    %c0_i32_0 = arith.constant 0 : i32
    return %arg0, %c0_i32 : i32, i32
  }
  func.func @transform_1(%arg0: i32) -> (i32, i32) {
    %c0_i32 = arith.constant 0 : i32
    %c0_i32_0 = arith.constant 0 : i32
    return %arg0, %c0_i32 : i32, i32
  }
  func.func @transform_2(%arg0: i32) -> (i32, i32) {
    %c0_i32 = arith.constant 0 : i32
    %c0_i32_0 = arith.constant 0 : i32
    return %arg0, %c0_i32 : i32, i32
  }
}

</mosaic_0001>

<llo_original>
// kernel: tpu_custom_call.1
$region0: #{tpu_custom_call.1}
  #allocation0 [shape = 'u32[]', space=smem, size = 0x4, offset = 0x4, fixed_abs, tag = 'smem constant byte address 0x4 - core index']
  #allocation1 [shape = 'u32[72,128]{1,0:T(1,128)}', space=vmem, size = 0x9000, scoped, tag = 'internal scratch']
  %s0 = inlined_call_operand.hbm [shape: f32[16,32], index: 0, kind: input, shape index: {}]
  %s1 = inlined_call_operand.vmem [shape: f32[16,1], index: 1, kind: output, shape index: {0}]
  %s2 = inlined_call_operand.vmem [shape: f32[16,1], index: 2, kind: output, shape index: {1}]
  %3 = xla_tuple %s1, %s2
  %s4 = sld [smem:[#allocation0]]
  $region26: #{tpu_custom_call.1} parent=0
    _
  %s6 = ssub.s32 1, %s4
  %s7 = scalar_select 0, %s6, %s4
  $region1: #{tpu_custom_call.1} parent=0
    #allocation2 [shape = 'u8[8192]{0}', space=vmem, size = 0x2000, scoped, tag = 'input window, operand 0, single buffered']
    #allocation3 [shape = 's32[1]{0}', space=sflag, size = 0x4, scoped, tag = 'scoped memory for tpu_custom_call.1']
    %8 = vsyncpa [#allocation3], 0
    // Predicated region
    $region2: #{tpu_custom_call.1} parent=1 // pred_check
      _
    $region3: #{tpu_custom_call.1} parent=1 // pred_check_branch
      %10 = sbr.rel (0) target = $region5
    $region4: #{tpu_custom_call.1} parent=1 // pred_region
      %12 = vsyncadd [#allocation3], 0
      %s13 = sshll.u32 %s0, 4
      %s14 = int_to_ptr.hbm [resolvable:$true] %s13
      %s15 = sshll.u32 [#allocation2], 4
      %s16 = int_to_ptr.vmem [resolvable:$true] %s15
      %21 = dma.hbm_to_vmem [thread:$0]  %s14, 256, %s16, [#allocation3], 128, 128, 8
    $region5: #{tpu_custom_call.1} parent=1 // pred_fallthru
      _
    // Predicated region
    $region6: #{tpu_custom_call.1} parent=1 // pred_check
      _
    $region7: #{tpu_custom_call.1} parent=1 // pred_check_branch
      %23 = sbr.rel (0) target = $region9
    $region8: #{tpu_custom_call.1} parent=1 // pred_region
      %25 = dma.done [#allocation3], 256
    $region9: #{tpu_custom_call.1} parent=1 // pred_fallthru
      _
    %v26 = vld [vmem:[#allocation2] sm:$0xff]
    %v27 = vld [vmem:[#allocation2 + $0x8] sm:$0xff]
    %v28 = vmul.f32 %v26, %v26
    %v29 = vmul.f32 %v27, %v27
    %vm30 = vcmask 261120
    %v31 = vsel %vm30, %v28, 0.0
    %32 = vadd.xlane.f32.xlu0 %v31
    %v33 = vpop.xlane.xlu0 %32
    %v34 = vsel %vm30, %v29, 0.0
    %35 = vadd.xlane.f32.xlu0 %v34
    %v36 = vpop.xlane.xlu0 %35
    %v37 = vrsqrt.pop %v33
    %v38 = vmul.f32 %v37, %v33
    %v39 = vmul.f32 %v38, %v37
    %v40 = vmul.f32 0.5, %v39
    %v41 = vsub.f32 1.5, %v40
    %v42 = vmul.f32 %v37, %v41
    %v43 = vmul.f32 %v33, %v42
    %vm44 = vcmp.eq.f32.partialorder %v33, inf
    %v45 = vsel %vm44, %v33, %v43
    %vm46 = vcmp.eq.f32.partialorder %v33, 0.0
    %v47 = vand.u32 %v33, 2147483648
    %v48 = vsel %vm46, %v47, %v45
    %v49 = vrsqrt.pop %v36
    %v50 = vmul.f32 %v49, %v36
    %v51 = vmul.f32 %v50, %v49
    %v52 = vmul.f32 0.5, %v51
    %v53 = vsub.f32 1.5, %v52
    %v54 = vmul.f32 %v49, %v53
    %v55 = vmul.f32 %v36, %v54
    %vm56 = vcmp.eq.f32.partialorder %v36, inf
    %v57 = vsel %vm56, %v36, %v55
    %vm58 = vcmp.eq.f32.partialorder %v36, 0.0
    %v59 = vand.u32 %v36, 2147483648
    %v60 = vsel %vm58, %v59, %v57
    %vm61 = vcmask 7168
    %62 = vst.msk [vmem:[%s1] sm:$0xff] %vm61, %v48
    %63 = vst.msk [vmem:[%s1 + $0x8] sm:$0xff] %vm61, %v60
    %v64 = vrsqrt.pop %v33
    %v65 = vmul.f32 %v64, %v33
    %v66 = vmul.f32 %v65, %v64
    %v67 = vmul.f32 0.5, %v66
    %v68 = vsub.f32 1.5, %v67
    %v69 = vmul.f32 %v64, %v68
    %vm70 = vweird.f32 %v33
    %vm71 = vweird.f32 %v64
    %vm72 = vmor %vm70, %vm71
    %v73 = vsel %vm72, %v64, %v69
    %v74 = vrsqrt.pop %v36
    %v75 = vmul.f32 %v74, %v36
    %v76 = vmul.f32 %v75, %v74
    %v77 = vmul.f32 0.5, %v76
    %v78 = vsub.f32 1.5, %v77
    %v79 = vmul.f32 %v74, %v78
    %vm80 = vweird.f32 %v36
    %vm81 = vweird.f32 %v74
    %vm82 = vmor %vm80, %vm81
    %v83 = vsel %vm82, %v74, %v79
    %84 = vst.msk [vmem:[%s2] sm:$0xff] %vm61, %v73
    %85 = vst.msk [vmem:[%s2 + $0x8] sm:$0xff] %vm61, %v83
    // Predicated region
    $region10: #{tpu_custom_call.1} parent=1 // pred_check
      _
    $region11: #{tpu_custom_call.1} parent=1 // pred_check_branch
      %87 = sbr.rel (0) target = $region13
    $region12: #{tpu_custom_call.1} parent=1 // pred_region
      _
    $region13: #{tpu_custom_call.1} parent=1 // pred_fallthru
      _
    // Predicated region
    $region14: #{tpu_custom_call.1} parent=1 // pred_check
      _
    $region15: #{tpu_custom_call.1} parent=1 // pred_check_branch
      %89 = sbr.rel (0) target = $region17
    $region16: #{tpu_custom_call.1} parent=1 // pred_region
      _
    $region17: #{tpu_custom_call.1} parent=1 // pred_fallthru
      _
    // Predicated region
    $region18: #{tpu_custom_call.1} parent=1 // pred_check
      _
    $region19: #{tpu_custom_call.1} parent=1 // pred_check_branch
      %91 = sbr.rel (0) target = $region21
    $region20: #{tpu_custom_call.1} parent=1 // pred_region
      _
    $region21: #{tpu_custom_call.1} parent=1 // pred_fallthru
      _
    // Predicated region
    $region22: #{tpu_custom_call.1} parent=1 // pred_check
      _
    $region23: #{tpu_custom_call.1} parent=1 // pred_check_branch
      %93 = sbr.rel (0) target = $region25
    $region24: #{tpu_custom_call.1} parent=1 // pred_region
      _
    $region25: #{tpu_custom_call.1} parent=1 // pred_fallthru
      _
    %94 = vsyncpa [#allocation3], 1

</llo_original>
